<compile_context>
chip_gen: v5e
topology: v5e:2x2
jax: 0.10.0
libtpu: 0.0.40
codegen_flags: <defaults>
</compile_context>

<pallas_src>
import numpy as np
import jax
import jax.numpy as jnp
from jax import lax
from jax.experimental import pallas as pl
from jax.experimental.pallas import tpu as pltpu

STATE_DIM = 4
FEAT = STATE_DIM + 1 + 2      # 7 = GAT in_features (columns :7 of fp)
FEAT_PAD = 8                  # pad 7 -> 8; column 7 carries the gated node mask
IN_W = 2 * FEAT_PAD           # 16: [u-features | d-features] block packing
HIDDEN = 64                   # self.hidden1
LANE = 2 * HIDDEN             # 128: [u-hidden | d-hidden] on the lane dim
TAU = 8                       # tau_num
ALPHA = 0.2                   # LeakyReLU slope inside GAT
N_MAX = 8                     # padded node count per branch
ROWS_PER_BATCH = 2 * N_MAX    # 16 rows per batch element (u rows then d rows)


# ---------------------------------------------------------------------------
# Pallas kernel (one grid step handles `bpb` batch elements, both branches)
# ---------------------------------------------------------------------------
def mc_kernel(x_ref, star_ref, sel_ref, msel_ref, w1_ref, wa1_ref,
              w2_ref, wa2_ref, fcw_ref, fcb_ref, o_ref):
    x = x_ref[0]                                     # (R, 16) packed node rows

    # node-validity mask rides in feature column 7 (its weight row is zero)
    msel = msel_ref[...]                                                  # (1, 16)
    m_col = jnp.sum(x * msel, axis=-1, keepdims=True)                     # (R, 1)
    m_row = lax.dot_general(msel, x, (((1,), (1,)), ((), ())),
                            preferred_element_type=jnp.float32)           # (1, R)

    # star adjacency: hoisted static pattern gated by the data mask; one bool
    # predicate shared by both GAT layers (no float adj kept / re-compared).
    adj_b = (star_ref[...] * m_col * m_row) > 0.5                         # (R, R)

    def gat(h, w_ref, wa_ref, apply_elu):
        wa = wa_ref[...]                             # (2, D): a folded into W
        # logits read `h` directly (a pre-folded into W on the host), so they
        # do not depend on the Wh matmul below.
        s1 = jnp.sum(h * wa[0:1, :], axis=-1, keepdims=True)              # (R, 1)
        s2 = lax.dot_general(wa[1:2, :], h, (((1,), (1,)), ((), ())),
                             preferred_element_type=jnp.float32)          # (1, R)
        e = s1 + s2                                                       # (R, R)
        e = jnp.where(e > 0, e, ALPHA * e)                                # LeakyReLU
        att = jnp.where(adj_b, e, -9e15)
        att = jnp.exp(att - jnp.max(att, axis=1, keepdims=True))
        att = att * pl.reciprocal(jnp.sum(att, axis=1, keepdims=True),
                                  approx=True)
        # MXU matmuls in bf16 operands, f32 accumulation (weights arrive bf16)
        Wh = jnp.dot(h.astype(jnp.bfloat16), w_ref[...],
                     preferred_element_type=jnp.float32)                  # (R,128)
        hp = jnp.dot(att.astype(jnp.bfloat16), Wh.astype(jnp.bfloat16),
                     preferred_element_type=jnp.float32)                  # (R,128)
        if apply_elu:
            # TODO(synk): expm1 would be bit-closer; exp-1 is within tolerance
            hp = jnp.where(hp > 0, hp, jnp.exp(hp) - 1.0)
        return hp

    h = gat(x, w1_ref, wa1_ref, True)                # GAT1 (concat=True -> ELU)
    h = h * m_col                                    # keep garbage rows out of GAT2
    h = gat(h, w2_ref, wa2_ref, False)               # out_att (concat=False)
    hm = h * m_col                                   # mask + (<2 nodes) gate

    # per-batch node sums via hoisted selector: lanes[:64]=u_sum, [64:]=d_sum
    s = jnp.dot(sel_ref[...], hm, preferred_element_type=jnp.float32)     # (bpb,128)

    # fc2 weights stacked so s@fcw == (u_sum + d_sum)@fc2_w ; relu fused into clip
    y = jnp.dot(s, fcw_ref[...], preferred_element_type=jnp.float32) + fcb_ref[...]
    o_ref[0] = jnp.clip(y, 0.0, 10.0)


def mc_forward(x_all, packed, *, batch_per_step=None):
    """x_all: (B*ROWS_PER_BATCH, IN_W) packed node rows.  Returns (B, TAU).

    batch_per_step defaults to min(B, 8) so R = 16*bpb caps at the MXU-native
    128 (good on v5e/v6e/v7x).  On v6e/v7x up to 16 (R=256) is also fine; keep
    R <= 256 so the (R,R) intermediates stay far below v7x's 64 MiB VMEM."""
    w1, wa1, w2, wa2, fcw, fcb = packed
    B = x_all.shape[0] // ROWS_PER_BATCH
    bpb = min(B, 8) if batch_per_step is None else int(batch_per_step)
    G = pl.cdiv(B, bpb)
    Bp = G * bpb
    if Bp != B:
        pad = jnp.zeros(((Bp - B) * ROWS_PER_BATCH, IN_W), x_all.dtype)
        x_all = jnp.concatenate([x_all, pad], axis=0)
    R = bpb * ROWS_PER_BATCH
    xg = x_all.reshape(G, R, IN_W)

    # ---- static structural masks, built once on the host (perf review) ----
    rid = np.arange(R)
    same_blk = (rid[:, None] // N_MAX) == (rid[None, :] // N_MAX)
    star = np.logical_xor((rid[:, None] % N_MAX) == 0, (rid[None, :] % N_MAX) == 0)
    star_f = jnp.asarray((same_blk & star).astype(np.float32))            # (R, R)
    sel = jnp.asarray((np.arange(bpb)[:, None] ==
                       (rid[None, :] // ROWS_PER_BATCH)).astype(np.float32))  # (bpb,R)
    msel_np = np.zeros((1, IN_W), np.float32)
    msel_np[0, FEAT_PAD - 1] = 1.0
    msel = jnp.asarray(msel_np)                                            # (1, 16)

    def const_spec(arr):
        z = (0,) * arr.ndim
        return pl.BlockSpec(arr.shape, lambda g, _z=z: _z)

    out = pl.pallas_call(
        mc_kernel,
        out_shape=jax.ShapeDtypeStruct((G, bpb, LANE), jnp.float32),
        grid=(G,),
        in_specs=[
            pl.BlockSpec((1, R, IN_W), lambda g: (g, 0, 0)),
            const_spec(star_f), const_spec(sel), const_spec(msel),
            const_spec(w1), const_spec(wa1), const_spec(w2), const_spec(wa2),
            const_spec(fcw), const_spec(fcb),
        ],
        out_specs=pl.BlockSpec((1, bpb, LANE), lambda g: (g, 0, 0)),
        compiler_params=pltpu.CompilerParams(dimension_semantics=("parallel",)),
    )(xg, star_f, sel, msel, w1, wa1, w2, wa2, fcw, fcb)
    return out.reshape(Bp, LANE)[:B, :TAU]


# ---------------------------------------------------------------------------
# Host-side glue: prepare_eg equivalent (partition + pad + pack), param packing
# ---------------------------------------------------------------------------
def prepare_inputs(fp_list, n_max=N_MAX):
    B = len(fp_list)
    x = np.zeros((B * 2 * n_max, IN_W), np.float32)
    for i, fp in enumerate(fp_list):
        fp = np.asarray(fp, np.float32)
        u = fp[fp[:, -3] <= 0][:, :FEAT]
        d = fp[fp[:, -3] >= 0][:, :FEAT]
        nu, nd = u.shape[0], d.shape[0]
        base = i * 2 * n_max
        x[base:base + nu, :FEAT] = u                        # upstream features
        if nu >= 2:                                         # <2 nodes -> branch zeroed
            x[base:base + nu, FEAT_PAD - 1] = 1.0
        x[base + n_max:base + n_max + nd, FEAT_PAD:FEAT_PAD + FEAT] = d
        if nd >= 2:
            x[base + n_max:base + n_max + nd, FEAT_PAD - 1] = 1.0
    return jnp.asarray(x)


def pack_params(p):
    def pad_rows(w):                                        # (7,64) -> (8,64)
        out = np.zeros((FEAT_PAD, HIDDEN), np.float32)
        out[:FEAT] = np.asarray(w, np.float32)
        return out

    w1 = np.zeros((IN_W, LANE), np.float32)                 # block-diag [Wu1, Wd1]
    w1[:FEAT_PAD, :HIDDEN] = pad_rows(p["wu1"])
    w1[FEAT_PAD:, HIDDEN:] = pad_rows(p["wd1"])

    w2 = np.zeros((LANE, LANE), np.float32)                 # block-diag [Wu2, Wd2]
    w2[:HIDDEN, :HIDDEN] = np.asarray(p["wu2"], np.float32)
    w2[HIDDEN:, HIDDEN:] = np.asarray(p["wd2"], np.float32)

    def fold_a(w_packed, au, ad):
        # wa[0] = W @ a_first, wa[1] = W @ a_second  (branch-packed), so the
        # kernel computes the attention logits directly from h.
        au = np.asarray(au, np.float32).reshape(-1)
        ad = np.asarray(ad, np.float32).reshape(-1)
        a_first = np.concatenate([au[:HIDDEN], ad[:HIDDEN]])
        a_second = np.concatenate([au[HIDDEN:], ad[HIDDEN:]])
        return np.stack([w_packed @ a_first, w_packed @ a_second], 0).astype(np.float32)

    wa1 = fold_a(w1, p["au1"], p["ad1"])                    # (2, 16)
    wa2 = fold_a(w2, p["au2"], p["ad2"])                    # (2, 128)

    fcw = np.zeros((LANE, LANE), np.float32)                # stacked + lane-padded fc2
    fw = np.asarray(p["fc2_w"], np.float32)
    fcw[:HIDDEN, :TAU] = fw
    fcw[HIDDEN:, :TAU] = fw
    fcb = np.zeros((1, LANE), np.float32)
    fcb[0, :TAU] = np.asarray(p["fc2_b"], np.float32).reshape(-1)

    return (jnp.asarray(w1, jnp.bfloat16), jnp.asarray(wa1),
            jnp.asarray(w2, jnp.bfloat16), jnp.asarray(wa2),
            jnp.asarray(fcw), jnp.asarray(fcb))


def init_params(key):
    ks = jax.random.split(key, 10)

    def glorot(k, shape):
        lim = float(np.sqrt(6.0 / (shape[0] + shape[1])))
        return jax.random.uniform(k, shape, jnp.float32, -lim, lim)

    return dict(
        wu1=glorot(ks[0], (FEAT, HIDDEN)), au1=glorot(ks[1], (2 * HIDDEN, 1)),
        wu2=glorot(ks[2], (HIDDEN, HIDDEN)), au2=glorot(ks[3], (2 * HIDDEN, 1)),
        wd1=glorot(ks[4], (FEAT, HIDDEN)), ad1=glorot(ks[5], (2 * HIDDEN, 1)),
        wd2=glorot(ks[6], (HIDDEN, HIDDEN)), ad2=glorot(ks[7], (2 * HIDDEN, 1)),
        fc2_w=glorot(ks[8], (HIDDEN, TAU)),
        fc2_b=glorot(ks[9], (1, TAU)),
    )


def reference_forward(fp_list, params):
    p = {k: np.asarray(v) for k, v in params.items()}

    def gat(h, adj, W, a, concat):
        Wh = h @ W
        e = (Wh @ a[:HIDDEN]) + (Wh @ a[HIDDEN:]).T
        e = np.where(e > 0, e, ALPHA * e)
        att = np.where(adj > 0, e, -9e15).astype(np.float64)
        att = att - att.max(axis=1, keepdims=True)
        att = np.exp(att)
        att = att / att.sum(axis=1, keepdims=True)
        hp = att @ Wh
        if concat:
            hp = np.where(hp > 0, hp, np.exp(hp) - 1.0)
        return hp

    def branch(x, W1, a1, W2, a2):
        n = x.shape[0]
        adj = np.zeros((n, n), np.float64)
        adj[0, :] = 1.0
        adj[:, 0] = 1.0
        np.fill_diagonal(adj, 0.0)
        h = gat(x.astype(np.float64), adj, W1, a1, True)
        h = gat(h, adj, W2, a2, False)
        s = h.sum(0)
        return np.zeros_like(s) if n < 2 else s

    rows = []
    for fp in fp_list:
        u = fp[fp[:, -3] <= 0][:, :FEAT]
        d = fp[fp[:, -3] >= 0][:, :FEAT]
        us = branch(u, p["wu1"], p["au1"], p["wu2"], p["au2"])
        ds = branch(d, p["wd1"], p["ad1"], p["wd2"], p["ad2"])
        y = np.maximum((us + ds) @ p["fc2_w"] + p["fc2_b"][0], 0.0)
        rows.append(np.clip(y, 0.0, 10.0))
    return np.stack(rows, 0).astype(np.float32)


if __name__ == "__main__":
    key = jax.random.PRNGKey(0)
    k_fp, k_par = jax.random.split(key)

    # Build the `fp` list: each element (n_i, 10); first 7 cols are features,
    # col index -3 (== 7) decides upstream/downstream membership.  The third
    # element has a 1-node upstream branch to exercise the <2-node gate.
    sign_lists = [[-1, -1, 1, 1, 1], [-1, -1, 1, 1, 1, -1], [-1, 1, 1, 1]]
    fp_list = []
    kk = jax.random.split(k_fp, len(sign_lists))
    for i, signs in enumerate(sign_lists):
        n = len(signs)
        arr = np.array(jax.random.normal(kk[i], (n, 10), jnp.float32))  # writable copy
        arr[:, -3] = np.asarray(signs, np.float32) * (np.abs(arr[:, -3]) + 0.1)
        fp_list.append(arr)

    params = init_params(k_par)
    x_all = prepare_inputs(fp_list)
    packed = pack_params(params)

    out = mc_forward(x_all, packed)          # one fused grid step for the batch
    out = jax.block_until_ready(out)

    ref = reference_forward(fp_list, params)
    # Tolerance accounts for bf16 MXU operands (8-bit mantissa) vs a float64
    # reference across two stacked GAT layers; real logic errors are O(1).
    np.testing.assert_allclose(np.asarray(out), ref, rtol=2e-2, atol=5e-2)
    print("KERNEL_OK")
</pallas_src>

<mosaic_0001>
module attributes {stable_mosaic.version = 11 : i64} {
  func.func @mc_kernel(%arg0: i32, %arg1: memref<1x48x16xf32, #tpu.memory_space<vmem>>, %arg2: memref<48x48xf32, #tpu.memory_space<vmem>>, %arg3: memref<3x48xf32, #tpu.memory_space<vmem>>, %arg4: memref<1x16xf32, #tpu.memory_space<vmem>>, %arg5: memref<16x128xbf16, #tpu.memory_space<vmem>>, %arg6: memref<2x16xf32, #tpu.memory_space<vmem>>, %arg7: memref<128x128xbf16, #tpu.memory_space<vmem>>, %arg8: memref<2x128xf32, #tpu.memory_space<vmem>>, %arg9: memref<128x128xf32, #tpu.memory_space<vmem>>, %arg10: memref<1x128xf32, #tpu.memory_space<vmem>>, %arg11: memref<1x3x128xf32, #tpu.memory_space<vmem>>) attributes {dimension_semantics = [#tpu.dimension_semantics<parallel>], iteration_bounds = array<i64: 1>, scalar_prefetch = 0 : i64, scratch_operands = 0 : i64, tpu.core_type = #tpu.core_type<tc>, window_params = [{transform_indices = @transform_0, window_bounds = array<i64: 1, 48, 16>}, {pipeline_mode = #tpu.pipeline_mode<synchronous>, transform_indices = @transform_1, window_bounds = array<i64: 48, 48>}, {pipeline_mode = #tpu.pipeline_mode<synchronous>, transform_indices = @transform_2, window_bounds = array<i64: 3, 48>}, {pipeline_mode = #tpu.pipeline_mode<synchronous>, transform_indices = @transform_3, window_bounds = array<i64: 1, 16>}, {pipeline_mode = #tpu.pipeline_mode<synchronous>, transform_indices = @transform_4, window_bounds = array<i64: 16, 128>}, {pipeline_mode = #tpu.pipeline_mode<synchronous>, transform_indices = @transform_5, window_bounds = array<i64: 2, 16>}, {pipeline_mode = #tpu.pipeline_mode<synchronous>, transform_indices = @transform_6, window_bounds = array<i64: 128, 128>}, {pipeline_mode = #tpu.pipeline_mode<synchronous>, transform_indices = @transform_7, window_bounds = array<i64: 2, 128>}, {pipeline_mode = #tpu.pipeline_mode<synchronous>, transform_indices = @transform_8, window_bounds = array<i64: 128, 128>}, {pipeline_mode = #tpu.pipeline_mode<synchronous>, transform_indices = @transform_9, window_bounds = array<i64: 1, 128>}, {transform_indices = @transform_10, window_bounds = array<i64: 1, 3, 128>}]} {
    %c0 = arith.constant 0 : index
    %c0_0 = arith.constant 0 : index
    %c0_1 = arith.constant 0 : index
    %0 = vector.load %arg1[%c0, %c0_0, %c0_1] : memref<1x48x16xf32, #tpu.memory_space<vmem>>, vector<1x48x16xf32>
    %1 = vector.shape_cast %0 : vector<1x48x16xf32> to vector<48x16xf32>
    %c0_2 = arith.constant 0 : index
    %c0_3 = arith.constant 0 : index
    %2 = vector.load %arg4[%c0_2, %c0_3] : memref<1x16xf32, #tpu.memory_space<vmem>>, vector<1x16xf32>
    %3 = vector.broadcast %2 : vector<1x16xf32> to vector<48x16xf32>
    %4 = arith.mulf %1, %3 : vector<48x16xf32>
    %cst = arith.constant dense<0.000000e+00> : vector<48xf32>
    %5 = vector.multi_reduction <add>, %4, %cst [1] : vector<48x16xf32> to vector<48xf32>
    %6 = vector.shape_cast %5 : vector<48xf32> to vector<48x1xf32>
    %cst_4 = arith.constant dense<0.000000e+00> : vector<1x48xf32>
    %7 = tpu.matmul %2, %1, %cst_4 {dimension_numbers = #tpu.dot_dimension_numbers<[1], [1], [0], [0], [0, 0, 1, 0], [], []>} : vector<1x16xf32>, vector<48x16xf32>, vector<1x48xf32> -> vector<1x48xf32>
    %c0_5 = arith.constant 0 : index
    %c0_6 = arith.constant 0 : index
    %8 = vector.load %arg2[%c0_5, %c0_6] : memref<48x48xf32, #tpu.memory_space<vmem>>, vector<48x48xf32>
    %9 = vector.broadcast %6 : vector<48x1xf32> to vector<48x48xf32>
    %10 = arith.mulf %8, %9 : vector<48x48xf32>
    %11 = vector.broadcast %7 : vector<1x48xf32> to vector<48x48xf32>
    %12 = arith.mulf %10, %11 : vector<48x48xf32>
    %cst_7 = arith.constant 5.000000e-01 : f32
    %13 = vector.broadcast %cst_7 : f32 to vector<48x48xf32>
    %14 = arith.cmpf ogt, %12, %13 : vector<48x48xf32>
    %c0_8 = arith.constant 0 : index
    %c0_9 = arith.constant 0 : index
    %15 = vector.load %arg6[%c0_8, %c0_9] : memref<2x16xf32, #tpu.memory_space<vmem>>, vector<2x16xf32>
    %16 = vector.extract_strided_slice %15 {offsets = [0, 0], sizes = [1, 16], strides = [1, 1]} : vector<2x16xf32> to vector<1x16xf32>
    %17 = vector.broadcast %16 : vector<1x16xf32> to vector<48x16xf32>
    %18 = arith.mulf %1, %17 : vector<48x16xf32>
    %cst_10 = arith.constant dense<0.000000e+00> : vector<48xf32>
    %19 = vector.multi_reduction <add>, %18, %cst_10 [1] : vector<48x16xf32> to vector<48xf32>
    %20 = vector.shape_cast %19 : vector<48xf32> to vector<48x1xf32>
    %21 = vector.extract_strided_slice %15 {offsets = [1, 0], sizes = [1, 16], strides = [1, 1]} : vector<2x16xf32> to vector<1x16xf32>
    %cst_11 = arith.constant dense<0.000000e+00> : vector<1x48xf32>
    %22 = tpu.matmul %21, %1, %cst_11 {dimension_numbers = #tpu.dot_dimension_numbers<[1], [1], [0], [0], [0, 0, 1, 0], [], []>} : vector<1x16xf32>, vector<48x16xf32>, vector<1x48xf32> -> vector<1x48xf32>
    %23 = vector.broadcast %20 : vector<48x1xf32> to vector<48x48xf32>
    %24 = vector.broadcast %22 : vector<1x48xf32> to vector<48x48xf32>
    %25 = arith.addf %23, %24 : vector<48x48xf32>
    %cst_12 = arith.constant 0.000000e+00 : f32
    %26 = vector.broadcast %cst_12 : f32 to vector<48x48xf32>
    %27 = arith.cmpf ogt, %25, %26 : vector<48x48xf32>
    %cst_13 = arith.constant 2.000000e-01 : f32
    %28 = vector.broadcast %cst_13 : f32 to vector<48x48xf32>
    %29 = arith.mulf %28, %25 : vector<48x48xf32>
    %30 = arith.select %27, %25, %29 : vector<48x48xi1>, vector<48x48xf32>
    %cst_14 = arith.constant -9.000000e+15 : f32
    %31 = vector.broadcast %cst_14 : f32 to vector<48x48xf32>
    %32 = arith.select %14, %30, %31 : vector<48x48xi1>, vector<48x48xf32>
    %cst_15 = arith.constant dense<0xFF800000> : vector<48xf32>
    %33 = vector.multi_reduction <maximumf>, %32, %cst_15 [1] : vector<48x48xf32> to vector<48xf32>
    %34 = vector.shape_cast %33 : vector<48xf32> to vector<48x1xf32>
    %35 = vector.broadcast %34 : vector<48x1xf32> to vector<48x48xf32>
    %36 = arith.subf %32, %35 : vector<48x48xf32>
    %37 = math.exp %36 : vector<48x48xf32>
    %cst_16 = arith.constant dense<0.000000e+00> : vector<48xf32>
    %38 = vector.multi_reduction <add>, %37, %cst_16 [1] : vector<48x48xf32> to vector<48xf32>
    %39 = vector.shape_cast %38 : vector<48xf32> to vector<48x1xf32>
    %40 = tpu.reciprocal %39 {approx = true} : vector<48x1xf32> -> vector<48x1xf32>
    %41 = vector.broadcast %40 : vector<48x1xf32> to vector<48x48xf32>
    %42 = arith.mulf %37, %41 : vector<48x48xf32>
    %43 = arith.truncf %1 : vector<48x16xf32> to vector<48x16xbf16>
    %c0_17 = arith.constant 0 : index
    %c0_18 = arith.constant 0 : index
    %44 = vector.load %arg5[%c0_17, %c0_18] : memref<16x128xbf16, #tpu.memory_space<vmem>>, vector<16x128xbf16>
    %cst_19 = arith.constant dense<0.000000e+00> : vector<48x128xf32>
    %45 = tpu.matmul %43, %44, %cst_19 {dimension_numbers = #tpu.dot_dimension_numbers<[1], [0], [0], [1], [0, 0, 1, 1], [], []>} : vector<48x16xbf16>, vector<16x128xbf16>, vector<48x128xf32> -> vector<48x128xf32>
    %46 = arith.truncf %42 : vector<48x48xf32> to vector<48x48xbf16>
    %47 = arith.truncf %45 : vector<48x128xf32> to vector<48x128xbf16>
    %cst_20 = arith.constant dense<0.000000e+00> : vector<48x128xf32>
    %48 = tpu.matmul %46, %47, %cst_20 {dimension_numbers = #tpu.dot_dimension_numbers<[1], [0], [0], [1], [0, 0, 1, 1], [], []>} : vector<48x48xbf16>, vector<48x128xbf16>, vector<48x128xf32> -> vector<48x128xf32>
    %cst_21 = arith.constant 0.000000e+00 : f32
    %49 = vector.broadcast %cst_21 : f32 to vector<48x128xf32>
    %50 = arith.cmpf ogt, %48, %49 : vector<48x128xf32>
    %51 = math.exp %48 : vector<48x128xf32>
    %cst_22 = arith.constant 1.000000e+00 : f32
    %52 = vector.broadcast %cst_22 : f32 to vector<48x128xf32>
    %53 = arith.subf %51, %52 : vector<48x128xf32>
    %54 = arith.select %50, %48, %53 : vector<48x128xi1>, vector<48x128xf32>
    %55 = vector.broadcast %6 : vector<48x1xf32> to vector<48x128xf32>
    %56 = arith.mulf %54, %55 : vector<48x128xf32>
    %c0_23 = arith.constant 0 : index
    %c0_24 = arith.constant 0 : index
    %57 = vector.load %arg8[%c0_23, %c0_24] : memref<2x128xf32, #tpu.memory_space<vmem>>, vector<2x128xf32>
    %58 = vector.extract_strided_slice %57 {offsets = [0, 0], sizes = [1, 128], strides = [1, 1]} : vector<2x128xf32> to vector<1x128xf32>
    %59 = vector.broadcast %58 : vector<1x128xf32> to vector<48x128xf32>
    %60 = arith.mulf %56, %59 : vector<48x128xf32>
    %cst_25 = arith.constant dense<0.000000e+00> : vector<48xf32>
    %61 = vector.multi_reduction <add>, %60, %cst_25 [1] : vector<48x128xf32> to vector<48xf32>
    %62 = vector.shape_cast %61 : vector<48xf32> to vector<48x1xf32>
    %63 = vector.extract_strided_slice %57 {offsets = [1, 0], sizes = [1, 128], strides = [1, 1]} : vector<2x128xf32> to vector<1x128xf32>
    %cst_26 = arith.constant dense<0.000000e+00> : vector<1x48xf32>
    %64 = tpu.matmul %63, %56, %cst_26 {dimension_numbers = #tpu.dot_dimension_numbers<[1], [1], [0], [0], [0, 0, 1, 0], [], []>} : vector<1x128xf32>, vector<48x128xf32>, vector<1x48xf32> -> vector<1x48xf32>
    %65 = vector.broadcast %62 : vector<48x1xf32> to vector<48x48xf32>
    %66 = vector.broadcast %64 : vector<1x48xf32> to vector<48x48xf32>
    %67 = arith.addf %65, %66 : vector<48x48xf32>
    %cst_27 = arith.constant 0.000000e+00 : f32
    %68 = vector.broadcast %cst_27 : f32 to vector<48x48xf32>
    %69 = arith.cmpf ogt, %67, %68 : vector<48x48xf32>
    %cst_28 = arith.constant 2.000000e-01 : f32
    %70 = vector.broadcast %cst_28 : f32 to vector<48x48xf32>
    %71 = arith.mulf %70, %67 : vector<48x48xf32>
    %72 = arith.select %69, %67, %71 : vector<48x48xi1>, vector<48x48xf32>
    %cst_29 = arith.constant -9.000000e+15 : f32
    %73 = vector.broadcast %cst_29 : f32 to vector<48x48xf32>
    %74 = arith.select %14, %72, %73 : vector<48x48xi1>, vector<48x48xf32>
    %cst_30 = arith.constant dense<0xFF800000> : vector<48xf32>
    %75 = vector.multi_reduction <maximumf>, %74, %cst_30 [1] : vector<48x48xf32> to vector<48xf32>
    %76 = vector.shape_cast %75 : vector<48xf32> to vector<48x1xf32>
    %77 = vector.broadcast %76 : vector<48x1xf32> to vector<48x48xf32>
    %78 = arith.subf %74, %77 : vector<48x48xf32>
    %79 = math.exp %78 : vector<48x48xf32>
    %cst_31 = arith.constant dense<0.000000e+00> : vector<48xf32>
    %80 = vector.multi_reduction <add>, %79, %cst_31 [1] : vector<48x48xf32> to vector<48xf32>
    %81 = vector.shape_cast %80 : vector<48xf32> to vector<48x1xf32>
    %82 = tpu.reciprocal %81 {approx = true} : vector<48x1xf32> -> vector<48x1xf32>
    %83 = vector.broadcast %82 : vector<48x1xf32> to vector<48x48xf32>
    %84 = arith.mulf %79, %83 : vector<48x48xf32>
    %85 = arith.truncf %56 : vector<48x128xf32> to vector<48x128xbf16>
    %c0_32 = arith.constant 0 : index
    %c0_33 = arith.constant 0 : index
    %86 = vector.load %arg7[%c0_32, %c0_33] : memref<128x128xbf16, #tpu.memory_space<vmem>>, vector<128x128xbf16>
    %cst_34 = arith.constant dense<0.000000e+00> : vector<48x128xf32>
    %87 = tpu.matmul %85, %86, %cst_34 {dimension_numbers = #tpu.dot_dimension_numbers<[1], [0], [0], [1], [0, 0, 1, 1], [], []>} : vector<48x128xbf16>, vector<128x128xbf16>, vector<48x128xf32> -> vector<48x128xf32>
    %88 = arith.truncf %84 : vector<48x48xf32> to vector<48x48xbf16>
    %89 = arith.truncf %87 : vector<48x128xf32> to vector<48x128xbf16>
    %cst_35 = arith.constant dense<0.000000e+00> : vector<48x128xf32>
    %90 = tpu.matmul %88, %89, %cst_35 {dimension_numbers = #tpu.dot_dimension_numbers<[1], [0], [0], [1], [0, 0, 1, 1], [], []>} : vector<48x48xbf16>, vector<48x128xbf16>, vector<48x128xf32> -> vector<48x128xf32>
    %91 = vector.broadcast %6 : vector<48x1xf32> to vector<48x128xf32>
    %92 = arith.mulf %90, %91 : vector<48x128xf32>
    %c0_36 = arith.constant 0 : index
    %c0_37 = arith.constant 0 : index
    %93 = vector.load %arg3[%c0_36, %c0_37] : memref<3x48xf32, #tpu.memory_space<vmem>>, vector<3x48xf32>
    %cst_38 = arith.constant dense<0.000000e+00> : vector<3x128xf32>
    %94 = tpu.matmul %93, %92, %cst_38 {dimension_numbers = #tpu.dot_dimension_numbers<[1], [0], [0], [1], [0, 0, 1, 1], [], []>} : vector<3x48xf32>, vector<48x128xf32>, vector<3x128xf32> -> vector<3x128xf32>
    %c0_39 = arith.constant 0 : index
    %c0_40 = arith.constant 0 : index
    %95 = vector.load %arg9[%c0_39, %c0_40] : memref<128x128xf32, #tpu.memory_space<vmem>>, vector<128x128xf32>
    %cst_41 = arith.constant dense<0.000000e+00> : vector<3x128xf32>
    %96 = tpu.matmul %94, %95, %cst_41 {dimension_numbers = #tpu.dot_dimension_numbers<[1], [0], [0], [1], [0, 0, 1, 1], [], []>} : vector<3x128xf32>, vector<128x128xf32>, vector<3x128xf32> -> vector<3x128xf32>
    %c0_42 = arith.constant 0 : index
    %c0_43 = arith.constant 0 : index
    %97 = vector.load %arg10[%c0_42, %c0_43] : memref<1x128xf32, #tpu.memory_space<vmem>>, vector<1x128xf32>
    %98 = vector.broadcast %97 : vector<1x128xf32> to vector<3x128xf32>
    %99 = arith.addf %96, %98 : vector<3x128xf32>
    %cst_44 = arith.constant 0.000000e+00 : f32
    %cst_45 = arith.constant 1.000000e+01 : f32
    %100 = vector.broadcast %cst_44 : f32 to vector<3x128xf32>
    %101 = arith.maximumf %100, %99 : vector<3x128xf32>
    %102 = vector.broadcast %cst_45 : f32 to vector<3x128xf32>
    %103 = arith.minimumf %102, %101 : vector<3x128xf32>
    %c0_46 = arith.constant 0 : index
    %c0_47 = arith.constant 0 : index
    %c0_48 = arith.constant 0 : index
    %104 = vector.load %arg11[%c0_46, %c0_47, %c0_48] : memref<1x3x128xf32, #tpu.memory_space<vmem>>, vector<1x3x128xf32>
    %105 = vector.shape_cast %104 : vector<1x3x128xf32> to vector<3x128xf32>
    %106 = vector.shape_cast %103 : vector<3x128xf32> to vector<1x3x128xf32>
    tpu.vector_store %arg11[%c0_46, %c0_47, %c0_48], %106 {strides = array<i32>} : memref<1x3x128xf32, #tpu.memory_space<vmem>>, vector<1x3x128xf32>,
    return
  }
  func.func @transform_0(%arg0: i32) -> (i32, i32, i32) {
    %c0_i32 = arith.constant 0 : i32
    %c0_i32_0 = arith.constant 0 : i32
    %c0_i32_1 = arith.constant 0 : i32
    return %arg0, %c0_i32, %c0_i32_0 : i32, i32, i32
  }
  func.func @transform_1(%arg0: i32) -> (i32, i32) {
    %c0_i32 = arith.constant 0 : i32
    %c0_i32_0 = arith.constant 0 : i32
    %c0_i32_1 = arith.constant 0 : i32
    return %c0_i32, %c0_i32_0 : i32, i32
  }
  func.func @transform_2(%arg0: i32) -> (i32, i32) {
    %c0_i32 = arith.constant 0 : i32
    %c0_i32_0 = arith.constant 0 : i32
    %c0_i32_1 = arith.constant 0 : i32
    return %c0_i32, %c0_i32_0 : i32, i32
  }
  func.func @transform_3(%arg0: i32) -> (i32, i32) {
    %c0_i32 = arith.constant 0 : i32
    %c0_i32_0 = arith.constant 0 : i32
    %c0_i32_1 = arith.constant 0 : i32
    return %c0_i32, %c0_i32_0 : i32, i32
  }
  func.func @transform_4(%arg0: i32) -> (i32, i32) {
    %c0_i32 = arith.constant 0 : i32
    %c0_i32_0 = arith.constant 0 : i32
    %c0_i32_1 = arith.constant 0 : i32
    return %c0_i32, %c0_i32_0 : i32, i32
  }
  func.func @transform_5(%arg0: i32) -> (i32, i32) {
    %c0_i32 = arith.constant 0 : i32
    %c0_i32_0 = arith.constant 0 : i32
    %c0_i32_1 = arith.constant 0 : i32
    return %c0_i32, %c0_i32_0 : i32, i32
  }
  func.func @transform_6(%arg0: i32) -> (i32, i32) {
    %c0_i32 = arith.constant 0 : i32
    %c0_i32_0 = arith.constant 0 : i32
    %c0_i32_1 = arith.constant 0 : i32
    return %c0_i32, %c0_i32_0 : i32, i32
  }
  func.func @transform_7(%arg0: i32) -> (i32, i32) {
    %c0_i32 = arith.constant 0 : i32
    %c0_i32_0 = arith.constant 0 : i32
    %c0_i32_1 = arith.constant 0 : i32
    return %c0_i32, %c0_i32_0 : i32, i32
  }
  func.func @transform_8(%arg0: i32) -> (i32, i32) {
    %c0_i32 = arith.constant 0 : i32
    %c0_i32_0 = arith.constant 0 : i32
    %c0_i32_1 = arith.constant 0 : i32
    return %c0_i32, %c0_i32_0 : i32, i32
  }
  func.func @transform_9(%arg0: i32) -> (i32, i32) {
    %c0_i32 = arith.constant 0 : i32
    %c0_i32_0 = arith.constant 0 : i32
    %c0_i32_1 = arith.constant 0 : i32
    return %c0_i32, %c0_i32_0 : i32, i32
  }
  func.func @transform_10(%arg0: i32) -> (i32, i32, i32) {
    %c0_i32 = arith.constant 0 : i32
    %c0_i32_0 = arith.constant 0 : i32
    %c0_i32_1 = arith.constant 0 : i32
    return %arg0, %c0_i32, %c0_i32_0 : i32, i32, i32
  }
}

</mosaic_0001>

<llo_original>
// kernel: tpu_custom_call.1
$region0: #{tpu_custom_call.1}
  #allocation0 [shape = 'u32[]', space=smem, size = 0x4, offset = 0x4, fixed_abs, tag = 'smem constant byte address 0x4 - core index']
  #allocation1 [shape = 'u32[72,128]{1,0:T(1,128)}', space=vmem, size = 0x9000, scoped, tag = 'internal scratch']
  %s0 = inlined_call_operand.vmem [shape: f32[1,48,16], index: 0, kind: input, shape index: {}]
  %s1 = inlined_call_operand.hbm [shape: f32[48,48], index: 1, kind: input, shape index: {}]
  %s2 = inlined_call_operand.vmem [shape: f32[3,48], index: 2, kind: input, shape index: {}]
  %s3 = inlined_call_operand.hbm [shape: f32[1,16], index: 3, kind: input, shape index: {}]
  %s4 = inlined_call_operand.hbm [shape: bf16[16,128], index: 4, kind: input, shape index: {}]
  %s5 = inlined_call_operand.hbm [shape: f32[2,16], index: 5, kind: input, shape index: {}]
  %s6 = inlined_call_operand.vmem [shape: bf16[128,128], index: 6, kind: input, shape index: {}]
  %s7 = inlined_call_operand.vmem [shape: f32[2,128], index: 7, kind: input, shape index: {}]
  %s8 = inlined_call_operand.hbm [shape: f32[128,128], index: 8, kind: input, shape index: {}]
  %s9 = inlined_call_operand.vmem [shape: f32[1,128], index: 9, kind: input, shape index: {}]
  %s10 = inlined_call_operand.vmem [shape: f32[1,3,128], index: 10, kind: output, shape index: {}]
  %s11 = sld [smem:[#allocation0]]
  $region70: #{tpu_custom_call.1} parent=0
    _
  %s13 = ssub.s32 1, %s11
  %s14 = scalar_select 0, %s13, %s11
  $region1: #{tpu_custom_call.1} parent=0
    #allocation2 [shape = 'u8[24576]{0}', space=vmem, size = 0x6000, scoped, tag = 'input window, operand 1, single buffered']
    #allocation3 [shape = 's32[1]{0}', space=sflag, size = 0x4, scoped, tag = 'scoped memory for tpu_custom_call.1']
    #allocation4 [shape = 'u8[512]{0}', space=vmem, size = 0x400, scoped, tag = 'input window, operand 3, single buffered']
    #allocation5 [shape = 's32[1]{0}', space=sflag, size = 0x4, scoped, tag = 'scoped memory for tpu_custom_call.1']
    #allocation6 [shape = 'u8[4096]{0}', space=vmem, size = 0x1000, scoped, tag = 'input window, operand 4, single buffered']
    #allocation7 [shape = 'u8[1024]{0}', space=vmem, size = 0x400, scoped, tag = 'input window, operand 5, single buffered']
    #allocation8 [shape = 's32[1]{0}', space=sflag, size = 0x4, scoped, tag = 'scoped memory for tpu_custom_call.1']
    #allocation9 [shape = 'u8[65536]{0}', space=vmem, size = 0x10000, scoped, tag = 'input window, operand 8, single buffered']
    %15 = vsyncpa [#allocation3], 0
    %16 = vsyncpa [#allocation5], 0
    %17 = vsyncpa [#allocation8], 0
    // Predicated region
    $region2: #{tpu_custom_call.1} parent=1 // pred_check
      _
    $region3: #{tpu_custom_call.1} parent=1 // pred_check_branch
      %19 = sbr.rel (0) target = $region5
    $region4: #{tpu_custom_call.1} parent=1 // pred_region
      _
    $region5: #{tpu_custom_call.1} parent=1 // pred_fallthru
      _
    // Predicated region
    $region6: #{tpu_custom_call.1} parent=1 // pred_check
      _
    $region7: #{tpu_custom_call.1} parent=1 // pred_check_branch
      %21 = sbr.rel (0) target = $region9
    $region8: #{tpu_custom_call.1} parent=1 // pred_region
      %23 = vsyncadd [#allocation3], 0
      %s24 = sshll.u32 %s1, 4
      %s25 = int_to_ptr.hbm [resolvable:$true] %s24
      %s26 = sshll.u32 [#allocation2], 4
      %s27 = int_to_ptr.vmem [resolvable:$true] %s26
      %32 = dma.hbm_to_vmem [thread:$0]  %s25, 768, %s27, [#allocation3], 128, 128, 8
    $region9: #{tpu_custom_call.1} parent=1 // pred_fallthru
      _
    // Predicated region
    $region10: #{tpu_custom_call.1} parent=1 // pred_check
      _
    $region11: #{tpu_custom_call.1} parent=1 // pred_check_branch
      %34 = sbr.rel (0) target = $region13
    $region12: #{tpu_custom_call.1} parent=1 // pred_region
      _
    $region13: #{tpu_custom_call.1} parent=1 // pred_fallthru
      _
    // Predicated region
    $region14: #{tpu_custom_call.1} parent=1 // pred_check
      _
    $region15: #{tpu_custom_call.1} parent=1 // pred_check_branch
      %36 = sbr.rel (0) target = $region17
    $region16: #{tpu_custom_call.1} parent=1 // pred_region
      %38 = vsyncadd [#allocation5], 0
      %s40 = sshll.u32 %s3, 4
      %s41 = int_to_ptr.hbm [resolvable:$true] %s40
      %s42 = sshll.u32 [#allocation4], 4
      %s43 = int_to_ptr.vmem [resolvable:$true] %s42
      %45 = dma.hbm_to_vmem [thread:$0]  %s41, 16, %s43, [#allocation5]
    $region17: #{tpu_custom_call.1} parent=1 // pred_fallthru
      _
    // Predicated region
    $region18: #{tpu_custom_call.1} parent=1 // pred_check
      _
    $region19: #{tpu_custom_call.1} parent=1 // pred_check_branch
      %47 = sbr.rel (0) target = $region21
    $region20: #{tpu_custom_call.1} parent=1 // pred_region
      %49 = vsyncadd [#allocation5], 0
      %s50 = sshll.u32 %s4, 4
      %s51 = int_to_ptr.hbm [resolvable:$true] %s50
      %s52 = sshll.u32 [#allocation6], 4
      %s53 = int_to_ptr.vmem [resolvable:$true] %s52
      %58 = dma.hbm_to_vmem [thread:$0]  %s51, 128, %s53, [#allocation5], 64, 64, 4
    $region21: #{tpu_custom_call.1} parent=1 // pred_fallthru
      _
    // Predicated region
    $region22: #{tpu_custom_call.1} parent=1 // pred_check
      _
    $region23: #{tpu_custom_call.1} parent=1 // pred_check_branch
      %60 = sbr.rel (0) target = $region25
    $region24: #{tpu_custom_call.1} parent=1 // pred_region
      %62 = vsyncadd [#allocation8], 0
      %s64 = sshll.u32 %s5, 4
      %s65 = int_to_ptr.hbm [resolvable:$true] %s64
      %s66 = sshll.u32 [#allocation7], 4
      %s67 = int_to_ptr.vmem [resolvable:$true] %s66
      %69 = dma.hbm_to_vmem [thread:$0]  %s65, 32, %s67, [#allocation8]
    $region25: #{tpu_custom_call.1} parent=1 // pred_fallthru
      _
    // Predicated region
    $region26: #{tpu_custom_call.1} parent=1 // pred_check
      _
    $region27: #{tpu_custom_call.1} parent=1 // pred_check_branch
      %71 = sbr.rel (0) target = $region29
    $region28: #{tpu_custom_call.1} parent=1 // pred_region
      _
    $region29: #{tpu_custom_call.1} parent=1 // pred_fallthru
      _
    // Predicated region
    $region30: #{tpu_custom_call.1} parent=1 // pred_check
      _
    $region31: #{tpu_custom_call.1} parent=1 // pred_check_branch
      %73 = sbr.rel (0) target = $region33
    $region32: #{tpu_custom_call.1} parent=1 // pred_region
      _
    $region33: #{tpu_custom_call.1} parent=1 // pred_fallthru
      _
    // Predicated region
    $region34: #{tpu_custom_call.1} parent=1 // pred_check
      _
    $region35: #{tpu_custom_call.1} parent=1 // pred_check_branch
      %75 = sbr.rel (0) target = $region37
    $region36: #{tpu_custom_call.1} parent=1 // pred_region
      %77 = vsyncadd [#allocation8], 0
      %s78 = sshll.u32 %s8, 4
      %s79 = int_to_ptr.hbm [resolvable:$true] %s78
      %s80 = sshll.u32 [#allocation9], 4
      %s81 = int_to_ptr.vmem [resolvable:$true] %s80
      %86 = dma.hbm_to_vmem [thread:$0]  %s79, 2048, %s81, [#allocation8], 128, 128, 8
    $region37: #{tpu_custom_call.1} parent=1 // pred_fallthru
      _
    // Predicated region
    $region38: #{tpu_custom_call.1} parent=1 // pred_check
      _
    $region39: #{tpu_custom_call.1} parent=1 // pred_check_branch
      %88 = sbr.rel (0) target = $region41
    $region40: #{tpu_custom_call.1} parent=1 // pred_region
      _
    $region41: #{tpu_custom_call.1} parent=1 // pred_fallthru
      _
    // Predicated region
    $region42: #{tpu_custom_call.1} parent=1 // pred_check
      _
    $region43: #{tpu_custom_call.1} parent=1 // pred_check_branch
      %90 = sbr.rel (0) target = $region45
    $region44: #{tpu_custom_call.1} parent=1 // pred_region
      %92 = dma.done [#allocation3], 768
    $region45: #{tpu_custom_call.1} parent=1 // pred_fallthru
      _
    // Predicated region
    $region46: #{tpu_custom_call.1} parent=1 // pred_check
      _
    $region47: #{tpu_custom_call.1} parent=1 // pred_check_branch
      %94 = sbr.rel (0) target = $region49
    $region48: #{tpu_custom_call.1} parent=1 // pred_region
      %96 = dma.done [#allocation5], 16
    $region49: #{tpu_custom_call.1} parent=1 // pred_fallthru
      _
    // Predicated region
    $region50: #{tpu_custom_call.1} parent=1 // pred_check
      _
    $region51: #{tpu_custom_call.1} parent=1 // pred_check_branch
      %98 = sbr.rel (0) target = $region53
    $region52: #{tpu_custom_call.1} parent=1 // pred_region
      %100 = dma.done [#allocation5], 128
    $region53: #{tpu_custom_call.1} parent=1 // pred_fallthru
      _
    // Predicated region
    $region54: #{tpu_custom_call.1} parent=1 // pred_check
      _
    $region55: #{tpu_custom_call.1} parent=1 // pred_check_branch
      %102 = sbr.rel (0) target = $region57
    $region56: #{tpu_custom_call.1} parent=1 // pred_region
      %104 = dma.done [#allocation8], 32
    $region57: #{tpu_custom_call.1} parent=1 // pred_fallthru
      _
    // Predicated region
    $region58: #{tpu_custom_call.1} parent=1 // pred_check
      _
    $region59: #{tpu_custom_call.1} parent=1 // pred_check_branch
      %106 = sbr.rel (0) target = $region61
    $region60: #{tpu_custom_call.1} parent=1 // pred_region
      %108 = dma.done [#allocation8], 2048
    $region61: #{tpu_custom_call.1} parent=1 // pred_fallthru
      _
    %v110 = vld [vmem:[%s0] sm:$0xff]
    %v111 = vld [vmem:[%s0 + $0x8] sm:$0xff]
    %v112 = vld [vmem:[%s0 + $0x10] sm:$0xff]
    %v113 = vld [vmem:[%s0 + $0x18] sm:$0xff]
    %v114 = vld [vmem:[%s0 + $0x20] sm:$0xff]
    %v115 = vld [vmem:[%s0 + $0x28] sm:$0xff]
    %v116 = vld [vmem:[#allocation4] sm:$0x1]
    %v118 = vperm.slane %v116, 0
    %v120 = vmul.f32 %v110, %v118
    %v121 = vmul.f32 %v111, %v118
    %v122 = vmul.f32 %v112, %v118
    %v123 = vmul.f32 %v113, %v118
    %v124 = vmul.f32 %v114, %v118
    %v125 = vmul.f32 %v115, %v118
    %vm126 = vcmask 130048
    %v127 = vsel %vm126, %v120, 0.0
    %128 = vadd.xlane.f32.xlu0 %v127
    %v129 = vpop.xlane.xlu0 %128
    %v130 = vsel %vm126, %v121, 0.0
    %131 = vadd.xlane.f32.xlu0 %v130
    %v132 = vpop.xlane.xlu0 %131
    %v133 = vsel %vm126, %v122, 0.0
    %134 = vadd.xlane.f32.xlu0 %v133
    %v135 = vpop.xlane.xlu0 %134
    %v136 = vsel %vm126, %v123, 0.0
    %137 = vadd.xlane.f32.xlu0 %v136
    %v138 = vpop.xlane.xlu0 %137
    %v139 = vsel %vm126, %v124, 0.0
    %140 = vadd.xlane.f32.xlu0 %v139
    %v141 = vpop.xlane.xlu0 %140
    %v142 = vsel %vm126, %v125, 0.0
    %143 = vadd.xlane.f32.xlu0 %v142
    %v144 = vpop.xlane.xlu0 %143
    %v145 = vsel %vm126, %v116, 0
    %v148 = vsel %vm126, %v110, 0
    %v151 = vsel %vm126, %v111, 0
    %v154 = vsel %vm126, %v112, 0
    %v157 = vsel %vm126, %v113, 0
    %v160 = vsel %vm126, %v114, 0
    %v163 = vsel %vm126, %v115, 0
    %165 = vmatpush.xpose.msra.mxu0 0.0
    %166 = vmatpush.xpose.msra.mxu0 0.0
    %167 = vmatpush.xpose.msra.mxu0 0.0
    %168 = vmatpush.xpose.msra.mxu0 0.0
    %169 = vmatpush.xpose.msra.mxu0 0.0
    %170 = vmatpush.xpose.msra.mxu0 0.0
    %171 = vmatpush.xpose.msra.mxu0 0.0
    %172 = vmatpush.xpose.msra.mxu0 0.0
    %173 = vmatpush.xpose.msra.mxu0 0.0
    %174 = vmatpush.xpose.msra.mxu0 0.0
    %175 = vmatpush.xpose.msra.mxu0 %v163
    %176 = vmatpush.xpose.msra.mxu0 %v160
    %177 = vmatpush.xpose.msra.mxu0 %v157
    %178 = vmatpush.xpose.msra.mxu0 %v154
    %179 = vmatpush.xpose.msra.mxu0 %v151
    %180 = vmatpush.xpose.msra.mxu0 %v148
    %181 = vmatmul.f32.gmra.mxu0 %v145
    %v182 = vpop.f32.mrf.mxu0
    %v183 = vadd.f32 0.0, %v182
    %184 = vdwg.mxu0
    %v185 = vld [vmem:[#allocation2] sm:$0xff]
    %v186 = vld [vmem:[#allocation2 + $0x8] sm:$0xff]
    %v187 = vld [vmem:[#allocation2 + $0x10] sm:$0xff]
    %v188 = vld [vmem:[#allocation2 + $0x18] sm:$0xff]
    %v189 = vld [vmem:[#allocation2 + $0x20] sm:$0xff]
    %v190 = vld [vmem:[#allocation2 + $0x28] sm:$0xff]
    %v191 = vmul.f32 %v185, %v129
    %v192 = vmul.f32 %v186, %v132
    %v193 = vmul.f32 %v187, %v135
    %v194 = vmul.f32 %v188, %v138
    %v195 = vmul.f32 %v189, %v141
    %v196 = vmul.f32 %v190, %v144
    %v197 = vperm.slane %v183, 0
    %v198 = vmul.f32 %v191, %v197
    %v199 = vmul.f32 %v192, %v197
    %v200 = vmul.f32 %v193, %v197
    %v201 = vmul.f32 %v194, %v197
    %v202 = vmul.f32 %v195, %v197
    %v203 = vmul.f32 %v196, %v197
    %vm204 = vcmp.gt.f32.partialorder %v198, 0.5
    %vm205 = vcmp.gt.f32.partialorder %v199, 0.5
    %vm206 = vcmp.gt.f32.partialorder %v200, 0.5
    %vm207 = vcmp.gt.f32.partialorder %v201, 0.5
    %vm208 = vcmp.gt.f32.partialorder %v202, 0.5
    %vm209 = vcmp.gt.f32.partialorder %v203, 0.5
    %v210 = vld [vmem:[#allocation7] sm:$0x3]
    %v211 = vperm.slane %v210, 0
    %v212 = vmul.f32 %v110, %v211
    %v213 = vmul.f32 %v111, %v211
    %v214 = vmul.f32 %v112, %v211
    %v215 = vmul.f32 %v113, %v211
    %v216 = vmul.f32 %v114, %v211
    %v217 = vmul.f32 %v115, %v211
    %v218 = vsel %vm126, %v212, 0.0
    %219 = vadd.xlane.f32.xlu0 %v218
    %v220 = vpop.xlane.xlu0 %219
    %v221 = vsel %vm126, %v213, 0.0
    %222 = vadd.xlane.f32.xlu0 %v221
    %v223 = vpop.xlane.xlu0 %222
    %v224 = vsel %vm126, %v214, 0.0
    %225 = vadd.xlane.f32.xlu0 %v224
    %v226 = vpop.xlane.xlu0 %225
    %v227 = vsel %vm126, %v215, 0.0
    %228 = vadd.xlane.f32.xlu0 %v227
    %v229 = vpop.xlane.xlu0 %228
    %v230 = vsel %vm126, %v216, 0.0
    %231 = vadd.xlane.f32.xlu0 %v230
    %v232 = vpop.xlane.xlu0 %231
    %v233 = vsel %vm126, %v217, 0.0
    %234 = vadd.xlane.f32.xlu0 %v233
    %v235 = vpop.xlane.xlu0 %234
    %v237 = vrot.slane %v210, 1
    %v238 = vsel %vm126, %v237, 0
    %240 = vmatpush.xpose.msra.mxu0 0.0
    %241 = vmatpush.xpose.msra.mxu0 0.0
    %242 = vmatpush.xpose.msra.mxu0 0.0
    %243 = vmatpush.xpose.msra.mxu0 0.0
    %244 = vmatpush.xpose.msra.mxu0 0.0
    %245 = vmatpush.xpose.msra.mxu0 0.0
    %246 = vmatpush.xpose.msra.mxu0 0.0
    %247 = vmatpush.xpose.msra.mxu0 0.0
    %248 = vmatpush.xpose.msra.mxu0 0.0
    %249 = vmatpush.xpose.msra.mxu0 0.0
    %250 = vmatpush.xpose.msra.mxu0 %v163
    %251 = vmatpush.xpose.msra.mxu0 %v160
    %252 = vmatpush.xpose.msra.mxu0 %v157
    %253 = vmatpush.xpose.msra.mxu0 %v154
    %254 = vmatpush.xpose.msra.mxu0 %v151
    %255 = vmatpush.xpose.msra.mxu0 %v148
    %256 = vmatmul.f32.gmra.mxu0 %v238
    %v257 = vpop.f32.mrf.mxu0
    %v258 = vadd.f32 0.0, %v257
    %259 = vdwg.mxu0
    %v260 = vperm.slane %v258, 0
    %v261 = vadd.f32 %v220, %v260
    %v262 = vadd.f32 %v223, %v260
    %v263 = vadd.f32 %v226, %v260
    %v264 = vadd.f32 %v229, %v260
    %v265 = vadd.f32 %v232, %v260
    %v266 = vadd.f32 %v235, %v260
    %vm267 = vcmp.gt.f32.partialorder %v261, 0.0
    %vm268 = vcmp.gt.f32.partialorder %v262, 0.0
    %vm269 = vcmp.gt.f32.partialorder %v263, 0.0
    %vm270 = vcmp.gt.f32.partialorder %v264, 0.0
    %vm271 = vcmp.gt.f32.partialorder %v265, 0.0
    %vm272 = vcmp.gt.f32.partialorder %v266, 0.0
    %v273 = vmul.f32 %v261, 0.2
    %v274 = vmul.f32 %v262, 0.2
    %v275 = vmul.f32 %v263, 0.2
    %v276 = vmul.f32 %v264, 0.2
    %v277 = vmul.f32 %v265, 0.2
    %v278 = vmul.f32 %v266, 0.2
    %v279 = vsel %vm267, %v261, %v273
    %v280 = vsel %vm268, %v262, %v274
    %v281 = vsel %vm269, %v263, %v275
    %v282 = vsel %vm270, %v264, %v276
    %v283 = vsel %vm271, %v265, %v277
    %v284 = vsel %vm272, %v266, %v278
    %v285 = vsel %vm204, %v279, -9e+15
    %v286 = vsel %vm205, %v280, -9e+15
    %v287 = vsel %vm206, %v281, -9e+15
    %v288 = vsel %vm207, %v282, -9e+15
    %v289 = vsel %vm208, %v283, -9e+15
    %v290 = vsel %vm209, %v284, -9e+15
    %vm291 = vcmask 392192
    %v292 = vsel %vm291, %v285, -inf
    %293 = vmax.xlane.f32.xlu0 %v292
    %v294 = vpop.xlane.xlu0 %293
    %v295 = vsel %vm291, %v286, -inf
    %296 = vmax.xlane.f32.xlu0 %v295
    %v297 = vpop.xlane.xlu0 %296
    %v298 = vsel %vm291, %v287, -inf
    %299 = vmax.xlane.f32.xlu0 %v298
    %v300 = vpop.xlane.xlu0 %299
    %v301 = vsel %vm291, %v288, -inf
    %302 = vmax.xlane.f32.xlu0 %v301
    %v303 = vpop.xlane.xlu0 %302
    %v304 = vsel %vm291, %v289, -inf
    %305 = vmax.xlane.f32.xlu0 %v304
    %v306 = vpop.xlane.xlu0 %305
    %v307 = vsel %vm291, %v290, -inf
    %308 = vmax.xlane.f32.xlu0 %v307
    %v309 = vpop.xlane.xlu0 %308
    %v310 = vsub.f32 %v285, %v294
    %v311 = vsub.f32 %v286, %v297
    %v312 = vsub.f32 %v287, %v300
    %v313 = vsub.f32 %v288, %v303
    %v314 = vsub.f32 %v289, %v306
    %v315 = vsub.f32 %v290, %v309
    %v316 = vmul.f32 %v310, 1.442695
    %v317 = vpow.pop %v316
    %v318 = vmul.f32 %v311, 1.442695
    %v319 = vpow.pop %v318
    %v320 = vmul.f32 %v312, 1.442695
    %v321 = vpow.pop %v320
    %v322 = vmul.f32 %v313, 1.442695
    %v323 = vpow.pop %v322
    %v324 = vmul.f32 %v314, 1.442695
    %v325 = vpow.pop %v324
    %v326 = vmul.f32 %v315, 1.442695
    %v327 = vpow.pop %v326
    %v328 = vsel %vm291, %v317, 0.0
    %329 = vadd.xlane.f32.xlu0 %v328
    %v330 = vpop.xlane.xlu0 %329
    %v331 = vsel %vm291, %v319, 0.0
    %332 = vadd.xlane.f32.xlu0 %v331
    %v333 = vpop.xlane.xlu0 %332
    %v334 = vsel %vm291, %v321, 0.0
    %335 = vadd.xlane.f32.xlu0 %v334
    %v336 = vpop.xlane.xlu0 %335
    %v337 = vsel %vm291, %v323, 0.0
    %338 = vadd.xlane.f32.xlu0 %v337
    %v339 = vpop.xlane.xlu0 %338
    %v340 = vsel %vm291, %v325, 0.0
    %341 = vadd.xlane.f32.xlu0 %v340
    %v342 = vpop.xlane.xlu0 %341
    %v343 = vsel %vm291, %v327, 0.0
    %344 = vadd.xlane.f32.xlu0 %v343
    %v345 = vpop.xlane.xlu0 %344
    %v346 = vrcp.pop %v330
    %v347 = vrcp.pop %v333
    %v348 = vrcp.pop %v336
    %v349 = vrcp.pop %v339
    %v350 = vrcp.pop %v342
    %v351 = vrcp.pop %v345
    %v352 = vmul.f32 %v317, %v346
    %v353 = vmul.f32 %v319, %v347
    %v354 = vmul.f32 %v321, %v348
    %v355 = vmul.f32 %v323, %v349
    %v356 = vmul.f32 %v325, %v350
    %v357 = vmul.f32 %v327, %v351
    %v358 = vpack.c.bf16 %v111, %v110
    %v359 = vpack.c.bf16 %v113, %v112
    %v360 = vpack.c.bf16 %v115, %v114
    %v361 = vld [vmem:[#allocation6] sm:$0xf]
    %v362 = vld [vmem:[#allocation6 + $0x4] sm:$0xf]
    %v365 = vunpack.c.l.b16 %v361
    %v366 = vunpack.c.l.b16 %v362
    %v367 = vpack.c.b16 %v366, %v365
    %v370 = vsel %vm126, %v358, 0
    %v373 = vsel %vm126, %v359, 0
    %v376 = vsel %vm126, %v360, 0
    %378 = vmatpush.bf16.msra.mxu0 0
    %379 = vmatpush.bf16.msra.mxu0 0
    %380 = vmatpush.bf16.msra.mxu0 0
    %381 = vmatpush.bf16.msra.mxu0 0
    %382 = vmatpush.bf16.msra.mxu0 0
    %383 = vmatpush.bf16.msra.mxu0 0
    %384 = vmatpush.bf16.msra.mxu0 0
    %385 = vmatpush.bf16.msra.mxu0 %v367
    %386 = vmatmul.bf16.gmra.mxu0 %v370
    %v387 = vpop.f32.mrf.mxu0
    %v388 = vadd.f32 0.0, %v387
    %v389 = vpop.f32.mrf.mxu0
    %v390 = vadd.f32 0.0, %v389
    %391 = vmatmul.bf16.gmra.mxu0 %v373
    %v392 = vpop.f32.mrf.mxu0
    %v393 = vadd.f32 0.0, %v392
    %v394 = vpop.f32.mrf.mxu0
    %v395 = vadd.f32 0.0, %v394
    %396 = vmatmul.bf16.gmra.mxu0 %v376
    %v397 = vpop.f32.mrf.mxu0
    %v398 = vadd.f32 0.0, %v397
    %v399 = vpop.f32.mrf.mxu0
    %v400 = vadd.f32 0.0, %v399
    %401 = vdwg.mxu0
    %v402 = vpack.c.bf16 %v353, %v352
    %v403 = vpack.c.bf16 %v355, %v354
    %v404 = vpack.c.bf16 %v357, %v356
    %v405 = vpack.c.bf16 %v390, %v388
    %v406 = vpack.c.bf16 %v395, %v393
    %v407 = vpack.c.bf16 %v400, %v398
    %v409 = vsel %vm291, %v402, 0
    %v412 = vsel %vm291, %v403, 0
    %v415 = vsel %vm291, %v404, 0
    %417 = vmatpush.bf16.msra.mxu0 0
    %418 = vmatpush.bf16.msra.mxu0 0
    %419 = vmatpush.bf16.msra.mxu0 0
    %420 = vmatpush.bf16.msra.mxu0 0
    %421 = vmatpush.bf16.msra.mxu0 0
    %422 = vmatpush.bf16.msra.mxu0 %v407
    %423 = vmatpush.bf16.msra.mxu0 %v406
    %424 = vmatpush.bf16.msra.mxu0 %v405
    %425 = vmatmul.bf16.gmra.mxu0 %v409
    %v426 = vpop.f32.mrf.mxu0
    %v427 = vadd.f32 0.0, %v426
    %v428 = vpop.f32.mrf.mxu0
    %v429 = vadd.f32 0.0, %v428
    %430 = vmatmul.bf16.gmra.mxu0 %v412
    %v431 = vpop.f32.mrf.mxu0
    %v432 = vadd.f32 0.0, %v431
    %v433 = vpop.f32.mrf.mxu0
    %v434 = vadd.f32 0.0, %v433
    %435 = vmatmul.bf16.gmra.mxu0 %v415
    %v436 = vpop.f32.mrf.mxu0
    %v437 = vadd.f32 0.0, %v436
    %v438 = vpop.f32.mrf.mxu0
    %v439 = vadd.f32 0.0, %v438
    %440 = vdwg.mxu0
    %vm441 = vcmp.gt.f32.partialorder %v427, 0.0
    %vm442 = vcmp.gt.f32.partialorder %v429, 0.0
    %vm443 = vcmp.gt.f32.partialorder %v432, 0.0
    %vm444 = vcmp.gt.f32.partialorder %v434, 0.0
    %vm445 = vcmp.gt.f32.partialorder %v437, 0.0
    %vm446 = vcmp.gt.f32.partialorder %v439, 0.0
    %v447 = vmul.f32 %v427, 1.442695
    %v448 = vpow.pop %v447
    %v449 = vmul.f32 %v429, 1.442695
    %v450 = vpow.pop %v449
    %v451 = vmul.f32 %v432, 1.442695
    %v452 = vpow.pop %v451
    %v453 = vmul.f32 %v434, 1.442695
    %v454 = vpow.pop %v453
    %v455 = vmul.f32 %v437, 1.442695
    %v456 = vpow.pop %v455
    %v457 = vmul.f32 %v439, 1.442695
    %v458 = vpow.pop %v457
    %v459 = vsub.f32 %v448, 1.0
    %v460 = vsub.f32 %v450, 1.0
    %v461 = vsub.f32 %v452, 1.0
    %v462 = vsub.f32 %v454, 1.0
    %v463 = vsub.f32 %v456, 1.0
    %v464 = vsub.f32 %v458, 1.0
    %v465 = vsel %vm441, %v427, %v459
    %v466 = vsel %vm442, %v429, %v460
    %v467 = vsel %vm443, %v432, %v461
    %v468 = vsel %vm444, %v434, %v462
    %v469 = vsel %vm445, %v437, %v463
    %v470 = vsel %vm446, %v439, %v464
    %v471 = vmul.f32 %v465, %v129
    %v472 = vmul.f32 %v466, %v132
    %v473 = vmul.f32 %v467, %v135
    %v474 = vmul.f32 %v468, %v138
    %v475 = vmul.f32 %v469, %v141
    %v476 = vmul.f32 %v470, %v144
    %v477 = vld [vmem:[%s7] sm:$0x3]
    %v478 = vperm.slane %v477, 0
    %v479 = vmul.f32 %v471, %v478
    %v480 = vmul.f32 %v472, %v478
    %v481 = vmul.f32 %v473, %v478
    %v482 = vmul.f32 %v474, %v478
    %v483 = vmul.f32 %v475, %v478
    %v484 = vmul.f32 %v476, %v478
    %485 = vadd.xlane.f32.xlu0 %v479
    %v486 = vpop.xlane.xlu0 %485
    %487 = vadd.xlane.f32.xlu0 %v480
    %v488 = vpop.xlane.xlu0 %487
    %489 = vadd.xlane.f32.xlu0 %v481
    %v490 = vpop.xlane.xlu0 %489
    %491 = vadd.xlane.f32.xlu0 %v482
    %v492 = vpop.xlane.xlu0 %491
    %493 = vadd.xlane.f32.xlu0 %v483
    %v494 = vpop.xlane.xlu0 %493
    %495 = vadd.xlane.f32.xlu0 %v484
    %v496 = vpop.xlane.xlu0 %495
    %v498 = vrot.slane %v477, 1
    %500 = vmatpush.xpose.msra.mxu0 0.0
    %501 = vmatpush.xpose.msra.mxu0 0.0
    %502 = vmatpush.xpose.msra.mxu0 0.0
    %503 = vmatpush.xpose.msra.mxu0 0.0
    %504 = vmatpush.xpose.msra.mxu0 0.0
    %505 = vmatpush.xpose.msra.mxu0 0.0
    %506 = vmatpush.xpose.msra.mxu0 0.0
    %507 = vmatpush.xpose.msra.mxu0 0.0
    %508 = vmatpush.xpose.msra.mxu0 0.0
    %509 = vmatpush.xpose.msra.mxu0 0.0
    %510 = vmatpush.xpose.msra.mxu0 %v476
    %511 = vmatpush.xpose.msra.mxu0 %v475
    %512 = vmatpush.xpose.msra.mxu0 %v474
    %513 = vmatpush.xpose.msra.mxu0 %v473
    %514 = vmatpush.xpose.msra.mxu0 %v472
    %515 = vmatpush.xpose.msra.mxu0 %v471
    %516 = vmatmul.f32.gmra.mxu0 %v498
    %v517 = vpop.f32.mrf.mxu0
    %v518 = vadd.f32 0.0, %v517
    %519 = vdwg.mxu0
    %v520 = vperm.slane %v518, 0
    %v521 = vadd.f32 %v486, %v520
    %v522 = vadd.f32 %v488, %v520
    %v523 = vadd.f32 %v490, %v520
    %v524 = vadd.f32 %v492, %v520
    %v525 = vadd.f32 %v494, %v520
    %v526 = vadd.f32 %v496, %v520
    %vm527 = vcmp.gt.f32.partialorder %v521, 0.0
    %vm528 = vcmp.gt.f32.partialorder %v522, 0.0
    %vm529 = vcmp.gt.f32.partialorder %v523, 0.0
    %vm530 = vcmp.gt.f32.partialorder %v524, 0.0
    %vm531 = vcmp.gt.f32.partialorder %v525, 0.0
    %vm532 = vcmp.gt.f32.partialorder %v526, 0.0
    %v533 = vmul.f32 %v521, 0.2
    %v534 = vmul.f32 %v522, 0.2
    %v535 = vmul.f32 %v523, 0.2
    %v536 = vmul.f32 %v524, 0.2
    %v537 = vmul.f32 %v525, 0.2
    %v538 = vmul.f32 %v526, 0.2
    %v539 = vsel %vm527, %v521, %v533
    %v540 = vsel %vm528, %v522, %v534
    %v541 = vsel %vm529, %v523, %v535
    %v542 = vsel %vm530, %v524, %v536
    %v543 = vsel %vm531, %v525, %v537
    %v544 = vsel %vm532, %v526, %v538
    %v545 = vsel %vm204, %v539, -9e+15
    %v546 = vsel %vm205, %v540, -9e+15
    %v547 = vsel %vm206, %v541, -9e+15
    %v548 = vsel %vm207, %v542, -9e+15
    %v549 = vsel %vm208, %v543, -9e+15
    %v550 = vsel %vm209, %v544, -9e+15
    %v551 = vsel %vm291, %v545, -inf
    %552 = vmax.xlane.f32.xlu0 %v551
    %v553 = vpop.xlane.xlu0 %552
    %v554 = vsel %vm291, %v546, -inf
    %555 = vmax.xlane.f32.xlu0 %v554
    %v556 = vpop.xlane.xlu0 %555
    %v557 = vsel %vm291, %v547, -inf
    %558 = vmax.xlane.f32.xlu0 %v557
    %v559 = vpop.xlane.xlu0 %558
    %v560 = vsel %vm291, %v548, -inf
    %561 = vmax.xlane.f32.xlu0 %v560
    %v562 = vpop.xlane.xlu0 %561
    %v563 = vsel %vm291, %v549, -inf
    %564 = vmax.xlane.f32.xlu0 %v563
    %v565 = vpop.xlane.xlu0 %564
    %v566 = vsel %vm291, %v550, -inf
    %567 = vmax.xlane.f32.xlu0 %v566
    %v568 = vpop.xlane.xlu0 %567
    %v569 = vsub.f32 %v545, %v553
    %v570 = vsub.f32 %v546, %v556
    %v571 = vsub.f32 %v547, %v559
    %v572 = vsub.f32 %v548, %v562
    %v573 = vsub.f32 %v549, %v565
    %v574 = vsub.f32 %v550, %v568
    %v575 = vmul.f32 %v569, 1.442695
    %v576 = vpow.pop %v575
    %v577 = vmul.f32 %v570, 1.442695
    %v578 = vpow.pop %v577
    %v579 = vmul.f32 %v571, 1.442695
    %v580 = vpow.pop %v579
    %v581 = vmul.f32 %v572, 1.442695
    %v582 = vpow.pop %v581
    %v583 = vmul.f32 %v573, 1.442695
    %v584 = vpow.pop %v583
    %v585 = vmul.f32 %v574, 1.442695
    %v586 = vpow.pop %v585
    %v587 = vsel %vm291, %v576, 0.0
    %588 = vadd.xlane.f32.xlu0 %v587
    %v589 = vpop.xlane.xlu0 %588
    %v590 = vsel %vm291, %v578, 0.0
    %591 = vadd.xlane.f32.xlu0 %v590
    %v592 = vpop.xlane.xlu0 %591
    %v593 = vsel %vm291, %v580, 0.0
    %594 = vadd.xlane.f32.xlu0 %v593
    %v595 = vpop.xlane.xlu0 %594
    %v596 = vsel %vm291, %v582, 0.0
    %597 = vadd.xlane.f32.xlu0 %v596
    %v598 = vpop.xlane.xlu0 %597
    %v599 = vsel %vm291, %v584, 0.0
    %600 = vadd.xlane.f32.xlu0 %v599
    %v601 = vpop.xlane.xlu0 %600
    %v602 = vsel %vm291, %v586, 0.0
    %603 = vadd.xlane.f32.xlu0 %v602
    %v604 = vpop.xlane.xlu0 %603
    %v605 = vrcp.pop %v589
    %v606 = vrcp.pop %v592
    %v607 = vrcp.pop %v595
    %v608 = vrcp.pop %v598
    %v609 = vrcp.pop %v601
    %v610 = vrcp.pop %v604
    %v611 = vmul.f32 %v576, %v605
    %v612 = vmul.f32 %v578, %v606
    %v613 = vmul.f32 %v580, %v607
    %v614 = vmul.f32 %v582, %v608
    %v615 = vmul.f32 %v584, %v609
    %v616 = vmul.f32 %v586, %v610
    %v617 = vpack.c.bf16 %v472, %v471
    %v618 = vpack.c.bf16 %v474, %v473
    %v619 = vpack.c.bf16 %v476, %v475
    %v620 = vld [vmem:[%s6] sm:$0xf]
    %v621 = vld [vmem:[%s6 + $0x4] sm:$0xf]
    %v622 = vld [vmem:[%s6 + $0x8] sm:$0xf]
    %v623 = vld [vmem:[%s6 + $0xc] sm:$0xf]
    %v624 = vld [vmem:[%s6 + $0x10] sm:$0xf]
    %v625 = vld [vmem:[%s6 + $0x14] sm:$0xf]
    %v626 = vld [vmem:[%s6 + $0x18] sm:$0xf]
    %v627 = vld [vmem:[%s6 + $0x1c] sm:$0xf]
    %v628 = vld [vmem:[%s6 + $0x20] sm:$0xf]
    %v629 = vld [vmem:[%s6 + $0x24] sm:$0xf]
    %v630 = vld [vmem:[%s6 + $0x28] sm:$0xf]
    %v631 = vld [vmem:[%s6 + $0x2c] sm:$0xf]
    %v632 = vld [vmem:[%s6 + $0x30] sm:$0xf]
    %v633 = vld [vmem:[%s6 + $0x34] sm:$0xf]
    %v634 = vld [vmem:[%s6 + $0x38] sm:$0xf]
    %v635 = vld [vmem:[%s6 + $0x3c] sm:$0xf]
    %v652 = vunpack.c.l.b16 %v620
    %v653 = vunpack.c.l.b16 %v621
    %v654 = vunpack.c.l.b16 %v622
    %v655 = vunpack.c.l.b16 %v623
    %v656 = vunpack.c.l.b16 %v624
    %v657 = vunpack.c.l.b16 %v625
    %v658 = vunpack.c.l.b16 %v626
    %v659 = vunpack.c.l.b16 %v627
    %v660 = vunpack.c.l.b16 %v628
    %v661 = vunpack.c.l.b16 %v629
    %v662 = vunpack.c.l.b16 %v630
    %v663 = vunpack.c.l.b16 %v631
    %v664 = vunpack.c.l.b16 %v632
    %v665 = vunpack.c.l.b16 %v633
    %v666 = vunpack.c.l.b16 %v634
    %v667 = vunpack.c.l.b16 %v635
    %v668 = vpack.c.b16 %v653, %v652
    %v669 = vpack.c.b16 %v655, %v654
    %v670 = vpack.c.b16 %v657, %v656
    %v671 = vpack.c.b16 %v659, %v658
    %v672 = vpack.c.b16 %v661, %v660
    %v673 = vpack.c.b16 %v663, %v662
    %v674 = vpack.c.b16 %v665, %v664
    %v675 = vpack.c.b16 %v667, %v666
    %684 = vmatpush.bf16.msra.mxu0 %v675
    %685 = vmatpush.bf16.msra.mxu0 %v674
    %686 = vmatpush.bf16.msra.mxu0 %v673
    %687 = vmatpush.bf16.msra.mxu0 %v672
    %688 = vmatpush.bf16.msra.mxu0 %v671
    %689 = vmatpush.bf16.msra.mxu0 %v670
    %690 = vmatpush.bf16.msra.mxu0 %v669
    %691 = vmatpush.bf16.msra.mxu0 %v668
    %692 = vmatmul.bf16.gmra.mxu0 %v617
    %v693 = vpop.f32.mrf.mxu0
    %v694 = vadd.f32 0.0, %v693
    %v695 = vpop.f32.mrf.mxu0
    %v696 = vadd.f32 0.0, %v695
    %697 = vmatmul.bf16.gmra.mxu0 %v618
    %v698 = vpop.f32.mrf.mxu0
    %v699 = vadd.f32 0.0, %v698
    %v700 = vpop.f32.mrf.mxu0
    %v701 = vadd.f32 0.0, %v700
    %702 = vmatmul.bf16.gmra.mxu0 %v619
    %v703 = vpop.f32.mrf.mxu0
    %v704 = vadd.f32 0.0, %v703
    %v705 = vpop.f32.mrf.mxu0
    %v706 = vadd.f32 0.0, %v705
    %707 = vdwg.mxu0
    %v708 = vpack.c.bf16 %v612, %v611
    %v709 = vpack.c.bf16 %v614, %v613
    %v710 = vpack.c.bf16 %v616, %v615
    %v711 = vpack.c.bf16 %v696, %v694
    %v712 = vpack.c.bf16 %v701, %v699
    %v713 = vpack.c.bf16 %v706, %v704
    %v715 = vsel %vm291, %v708, 0
    %v718 = vsel %vm291, %v709, 0
    %v721 = vsel %vm291, %v710, 0
    %723 = vmatpush.bf16.msra.mxu0 0
    %724 = vmatpush.bf16.msra.mxu0 0
    %725 = vmatpush.bf16.msra.mxu0 0
    %726 = vmatpush.bf16.msra.mxu0 0
    %727 = vmatpush.bf16.msra.mxu0 0
    %728 = vmatpush.bf16.msra.mxu0 %v713
    %729 = vmatpush.bf16.msra.mxu0 %v712
    %730 = vmatpush.bf16.msra.mxu0 %v711
    %731 = vmatmul.bf16.gmra.mxu0 %v715
    %v732 = vpop.f32.mrf.mxu0
    %v733 = vadd.f32 0.0, %v732
    %v734 = vpop.f32.mrf.mxu0
    %v735 = vadd.f32 0.0, %v734
    %736 = vmatmul.bf16.gmra.mxu0 %v718
    %v737 = vpop.f32.mrf.mxu0
    %v738 = vadd.f32 0.0, %v737
    %v739 = vpop.f32.mrf.mxu0
    %v740 = vadd.f32 0.0, %v739
    %741 = vmatmul.bf16.gmra.mxu0 %v721
    %v742 = vpop.f32.mrf.mxu0
    %v743 = vadd.f32 0.0, %v742
    %v744 = vpop.f32.mrf.mxu0
    %v745 = vadd.f32 0.0, %v744
    %746 = vdwg.mxu0
    %v747 = vmul.f32 %v733, %v129
    %v748 = vmul.f32 %v735, %v132
    %v749 = vmul.f32 %v738, %v135
    %v750 = vmul.f32 %v740, %v138
    %v751 = vmul.f32 %v743, %v141
    %v752 = vmul.f32 %v745, %v144
    %v753 = vld [vmem:[%s2] sm:$0x7]
    %v755 = vsel %vm291, %v753, 0
    %757 = vmatpush.msra.mxu0 0.0
    %758 = vmatpush.msra.mxu0 0.0
    %759 = vmatpush.msra.mxu0 0.0
    %760 = vmatpush.msra.mxu0 0.0
    %761 = vmatpush.msra.mxu0 0.0
    %762 = vmatpush.msra.mxu0 0.0
    %763 = vmatpush.msra.mxu0 0.0
    %764 = vmatpush.msra.mxu0 0.0
    %765 = vmatpush.msra.mxu0 0.0
    %766 = vmatpush.msra.mxu0 0.0
    %767 = vmatpush.msra.mxu0 %v752
    %768 = vmatpush.msra.mxu0 %v751
    %769 = vmatpush.msra.mxu0 %v750
    %770 = vmatpush.msra.mxu0 %v749
    %771 = vmatpush.msra.mxu0 %v748
    %772 = vmatpush.msra.mxu0 %v747
    %773 = vmatmul.f32.gmra.mxu0 %v755
    %v774 = vpop.f32.mrf.mxu0
    %v775 = vadd.f32 0.0, %v774
    %776 = vdwg.mxu0
    %v777 = vld [vmem:[#allocation9] sm:$0xff]
    %v778 = vld [vmem:[#allocation9 + $0x8] sm:$0xff]
    %v779 = vld [vmem:[#allocation9 + $0x10] sm:$0xff]
    %v780 = vld [vmem:[#allocation9 + $0x18] sm:$0xff]
    %v781 = vld [vmem:[#allocation9 + $0x20] sm:$0xff]
    %v782 = vld [vmem:[#allocation9 + $0x28] sm:$0xff]
    %v783 = vld [vmem:[#allocation9 + $0x30] sm:$0xff]
    %v784 = vld [vmem:[#allocation9 + $0x38] sm:$0xff]
    %v785 = vld [vmem:[#allocation9 + $0x40] sm:$0xff]
    %v786 = vld [vmem:[#allocation9 + $0x48] sm:$0xff]
    %v787 = vld [vmem:[#allocation9 + $0x50] sm:$0xff]
    %v788 = vld [vmem:[#allocation9 + $0x58] sm:$0xff]
    %v789 = vld [vmem:[#allocation9 + $0x60] sm:$0xff]
    %v790 = vld [vmem:[#allocation9 + $0x68] sm:$0xff]
    %v791 = vld [vmem:[#allocation9 + $0x70] sm:$0xff]
    %v792 = vld [vmem:[#allocation9 + $0x78] sm:$0xff]
    %v793 = vld [vmem:[%s9] sm:$0x1]
    %v795 = vperm.slane %v793, 0
    %797 = vmatpush.msra.mxu0 %v792
    %798 = vmatpush.msra.mxu0 %v791
    %799 = vmatpush.msra.mxu0 %v790
    %800 = vmatpush.msra.mxu0 %v789
    %801 = vmatpush.msra.mxu0 %v788
    %802 = vmatpush.msra.mxu0 %v787
    %803 = vmatpush.msra.mxu0 %v786
    %804 = vmatpush.msra.mxu0 %v785
    %805 = vmatpush.msra.mxu0 %v784
    %806 = vmatpush.msra.mxu0 %v783
    %807 = vmatpush.msra.mxu0 %v782
    %808 = vmatpush.msra.mxu0 %v781
    %809 = vmatpush.msra.mxu0 %v780
    %810 = vmatpush.msra.mxu0 %v779
    %811 = vmatpush.msra.mxu0 %v778
    %812 = vmatpush.msra.mxu0 %v777
    %813 = vmatmul.f32.gmra.mxu0 %v775
    %v814 = vpop.f32.mrf.mxu0
    %v815 = vadd.f32 %v795, %v814
    %816 = vdwg.mxu0
    %v817 = vmax.f32 %v815, 0.0
    %v818 = vmin.f32 %v817, 10.0
    %819 = vst [vmem:[%s10] sm:$0x7] %v818
    // Predicated region
    $region62: #{tpu_custom_call.1} parent=1 // pred_check
      _
    $region63: #{tpu_custom_call.1} parent=1 // pred_check_branch
      %821 = sbr.rel (0) target = $region65
    $region64: #{tpu_custom_call.1} parent=1 // pred_region
      _
    $region65: #{tpu_custom_call.1} parent=1 // pred_fallthru
      _
    // Predicated region
    $region66: #{tpu_custom_call.1} parent=1 // pred_check
      _
    $region67: #{tpu_custom_call.1} parent=1 // pred_check_branch
      %823 = sbr.rel (0) target = $region69
    $region68: #{tpu_custom_call.1} parent=1 // pred_region
      _
    $region69: #{tpu_custom_call.1} parent=1 // pred_fallthru
      _
    %824 = vsyncpa [#allocation3], 1
    %825 = vsyncpa [#allocation5], 1
    %826 = vsyncpa [#allocation8], 1

</llo_original>
